<compile_context>
chip_gen: v6e
topology: v6e:2x2x1
jax: 0.10.0
libtpu: 0.0.40
codegen_flags: <defaults>
</compile_context>

<pallas_src>
import functools

import jax
import jax.numpy as jnp
from jax.experimental import pallas as pl
from jax.experimental.pallas import tpu as pltpu


def _round_up(x, m):
    return -(-x // m) * m


def time_dynamics_kernel(t_ref, vec_ref, w1_ref, w2f_ref, out_ref, *, D, H, M):
    # vec_ref rows: 0 = x_i, 1 = delta (= x_f - x_i), 2 = b1, 3 = b2' (folded)
    t = t_ref[...]                         # (T_BLK, 1)
    xi = vec_ref[0:1, 0:D]                 # (1, D)
    delta = vec_ref[1:2, 0:D]              # (1, D)
    b1 = vec_ref[2:3, 0:H]                 # (1, H)
    b2f = vec_ref[3:4, 0:M]                # (1, M)

    # path(t) = x_i + t * delta  -> (T_BLK, D)
    curr_x = xi + t * delta

    # hidden layer of deriv_y
    h = jnp.tanh(
        jnp.dot(curr_x, w1_ref[...], preferred_element_type=jnp.float32) + b1
    )

    # J @ direction, with direction already folded into W2'/b2'
    out_ref[...] = (
        jnp.dot(h, w2f_ref[...], preferred_element_type=jnp.float32) + b2f
    )


def time_dynamics(t, x_i, x_f, w1, b1, w2, b2, *, t_block=512):
    """Parameter plumbing / algebraic folding in plain JAX, hot path in Pallas."""
    T = t.shape[0]
    D = x_i.shape[-1]
    H = w1.shape[-1]
    MD = w2.shape[-1]
    M = MD // D

    f32 = jnp.float32
    x_i2 = x_i.reshape(1, D).astype(f32)
    x_f2 = x_f.reshape(1, D).astype(f32)
    delta = x_f2 - x_i2                                    # (1, D)
    direction = delta.reshape(D)                           # (D,)

    # Fold the Jacobian-vector product into the second layer's weights/bias.
    w2_fold = jnp.einsum(
        "hmd,d->hm", w2.astype(f32).reshape(H, M, D), direction
    )                                                      # (H, M)
    b2_fold = jnp.einsum(
        "md,d->m", b2.astype(f32).reshape(M, D), direction
    ).reshape(1, M)                                        # (1, M)

    # Pack all (1, *) vectors into one small operand (each in its own row,
    # starting at lane 0).
    W = max(D, H, M)
    packed = jnp.zeros((4, W), f32)
    packed = packed.at[0, :D].set(x_i2[0])
    packed = packed.at[1, :D].set(delta[0])
    packed = packed.at[2, :H].set(b1.astype(f32).reshape(H))
    packed = packed.at[3, :M].set(b2_fold[0])

    # Grid over T; weights / packed vectors stay VMEM-resident across steps.
    t_blk = min(t_block, _round_up(T, 8))                  # multiple of 8
    t_pad = _round_up(T, t_blk)
    t_in = jnp.zeros((t_pad, 1), f32).at[:T, :].set(t.reshape(T, 1).astype(f32))
    grid = (t_pad // t_blk,)

    kernel = functools.partial(time_dynamics_kernel, D=D, H=H, M=M)

    out = pl.pallas_call(
        kernel,
        out_shape=jax.ShapeDtypeStruct((t_pad, M), f32),
        grid=grid,
        in_specs=[
            pl.BlockSpec((t_blk, 1), lambda i: (i, 0)),    # t       (streamed)
            pl.BlockSpec((4, W), lambda i: (0, 0)),        # packed  (resident)
            pl.BlockSpec((D, H), lambda i: (0, 0)),        # W1      (resident)
            pl.BlockSpec((H, M), lambda i: (0, 0)),        # W2'     (resident)
        ],
        out_specs=pl.BlockSpec((t_blk, M), lambda i: (i, 0)),
        compiler_params=pltpu.CompilerParams(
            dimension_semantics=("parallel",)
        ),
    )(t_in, packed, w1.astype(f32), w2_fold)

    return out[:T]


def time_dynamics_ref(t, x_i, x_f, w1, b1, w2, b2):
    """Pure-JAX reference mirroring the PyTorch forward (unfolded math)."""
    D = x_i.shape[-1]
    MD = w2.shape[-1]
    M = MD // D
    curr_x = (1.0 - t) * x_i + t * x_f                     # (T, D)
    h = jnp.tanh(curr_x @ w1 + b1)                         # (T, H)
    jac = (h @ w2 + b2).reshape(t.shape[0], M, D)          # (T, M, D)
    direction = (x_f - x_i).reshape(D)
    return jnp.einsum("tmd,d->tm", jac, direction)         # (T, M)


if __name__ == "__main__":
    # Small, module-consistent shapes:
    #   D = 8 (x dim), M = 8 (y dim), H = 32 (MLP hidden), T = 8 time points
    D, M, H, T = 8, 8, 32, 8

    key = jax.random.PRNGKey(0)
    k_t, k_xi, k_xf, k_w1, k_b1, k_w2, k_b2 = jax.random.split(key, 7)

    t = jax.random.uniform(k_t, (T, 1), dtype=jnp.float32)
    x_i = jax.random.normal(k_xi, (1, D), dtype=jnp.float32)
    x_f = jax.random.normal(k_xf, (1, D), dtype=jnp.float32)

    w1 = jax.random.normal(k_w1, (D, H), dtype=jnp.float32) * 0.1
    b1 = jax.random.normal(k_b1, (1, H), dtype=jnp.float32) * 0.1
    w2 = jax.random.normal(k_w2, (H, M * D), dtype=jnp.float32) * 0.1
    b2 = jax.random.normal(k_b2, (1, M * D), dtype=jnp.float32) * 0.1

    y_inc = time_dynamics(t, x_i, x_f, w1, b1, w2, b2)
    jax.block_until_ready(y_inc)

    y_ref = time_dynamics_ref(t, x_i, x_f, w1, b1, w2, b2)
    assert y_inc.shape == (T, M)
    assert jnp.allclose(y_inc, y_ref, atol=1e-4, rtol=1e-4)

    print("KERNEL_OK")
</pallas_src>

<mosaic_0001>
module attributes {stable_mosaic.version = 11 : i64} {
  func.func @time_dynamics_kernel(%arg0: i32, %arg1: memref<8x1xf32, #tpu.memory_space<vmem>>, %arg2: memref<4x32xf32, #tpu.memory_space<vmem>>, %arg3: memref<8x32xf32, #tpu.memory_space<vmem>>, %arg4: memref<32x8xf32, #tpu.memory_space<vmem>>, %arg5: memref<8x8xf32, #tpu.memory_space<vmem>>) attributes {dimension_semantics = [#tpu.dimension_semantics<parallel>], iteration_bounds = array<i64: 1>, scalar_prefetch = 0 : i64, scratch_operands = 0 : i64, tpu.core_type = #tpu.core_type<tc>, window_params = [{transform_indices = @transform_0, window_bounds = array<i64: 8, 1>}, {pipeline_mode = #tpu.pipeline_mode<synchronous>, transform_indices = @transform_1, window_bounds = array<i64: 4, 32>}, {pipeline_mode = #tpu.pipeline_mode<synchronous>, transform_indices = @transform_2, window_bounds = array<i64: 8, 32>}, {pipeline_mode = #tpu.pipeline_mode<synchronous>, transform_indices = @transform_3, window_bounds = array<i64: 32, 8>}, {transform_indices = @transform_4, window_bounds = array<i64: 8, 8>}]} {
    %c0 = arith.constant 0 : index
    %c0_0 = arith.constant 0 : index
    %0 = vector.load %arg1[%c0, %c0_0] : memref<8x1xf32, #tpu.memory_space<vmem>>, vector<8x1xf32>
    %c0_1 = arith.constant 0 : index
    %c0_2 = arith.constant 0 : index
    %1 = vector.load %arg2[%c0_1, %c0_2] : memref<4x32xf32, #tpu.memory_space<vmem>>, vector<1x8xf32>
    %c1 = arith.constant 1 : index
    %c0_3 = arith.constant 0 : index
    %2 = vector.load %arg2[%c1, %c0_3] : memref<4x32xf32, #tpu.memory_space<vmem>>, vector<1x8xf32>
    %c2 = arith.constant 2 : index
    %c0_4 = arith.constant 0 : index
    %3 = vector.load %arg2[%c2, %c0_4] : memref<4x32xf32, #tpu.memory_space<vmem>>, vector<1x32xf32>
    %c3 = arith.constant 3 : index
    %c0_5 = arith.constant 0 : index
    %4 = vector.load %arg2[%c3, %c0_5] : memref<4x32xf32, #tpu.memory_space<vmem>>, vector<1x8xf32>
    %5 = vector.broadcast %0 : vector<8x1xf32> to vector<8x8xf32>
    %6 = vector.broadcast %2 : vector<1x8xf32> to vector<8x8xf32>
    %7 = arith.mulf %5, %6 : vector<8x8xf32>
    %8 = vector.broadcast %1 : vector<1x8xf32> to vector<8x8xf32>
    %9 = arith.addf %8, %7 : vector<8x8xf32>
    %c0_6 = arith.constant 0 : index
    %c0_7 = arith.constant 0 : index
    %10 = vector.load %arg3[%c0_6, %c0_7] : memref<8x32xf32, #tpu.memory_space<vmem>>, vector<8x32xf32>
    %cst = arith.constant dense<0.000000e+00> : vector<8x32xf32>
    %11 = tpu.matmul %9, %10, %cst {dimension_numbers = #tpu.dot_dimension_numbers<[1], [0], [0], [1], [0, 0, 1, 1], [], []>} : vector<8x8xf32>, vector<8x32xf32>, vector<8x32xf32> -> vector<8x32xf32>
    %12 = vector.broadcast %3 : vector<1x32xf32> to vector<8x32xf32>
    %13 = arith.addf %11, %12 : vector<8x32xf32>
    %14 = math.tanh %13 : vector<8x32xf32>
    %c0_8 = arith.constant 0 : index
    %c0_9 = arith.constant 0 : index
    %15 = vector.load %arg4[%c0_8, %c0_9] : memref<32x8xf32, #tpu.memory_space<vmem>>, vector<32x8xf32>
    %cst_10 = arith.constant dense<0.000000e+00> : vector<8x8xf32>
    %16 = tpu.matmul %14, %15, %cst_10 {dimension_numbers = #tpu.dot_dimension_numbers<[1], [0], [0], [1], [0, 0, 1, 1], [], []>} : vector<8x32xf32>, vector<32x8xf32>, vector<8x8xf32> -> vector<8x8xf32>
    %17 = vector.broadcast %4 : vector<1x8xf32> to vector<8x8xf32>
    %18 = arith.addf %16, %17 : vector<8x8xf32>
    %c0_11 = arith.constant 0 : index
    %c0_12 = arith.constant 0 : index
    %19 = vector.load %arg5[%c0_11, %c0_12] : memref<8x8xf32, #tpu.memory_space<vmem>>, vector<8x8xf32>
    tpu.vector_store %arg5[%c0_11, %c0_12], %18 {strides = array<i32>} : memref<8x8xf32, #tpu.memory_space<vmem>>, vector<8x8xf32>,
    return
  }
  func.func @transform_0(%arg0: i32) -> (i32, i32) {
    %c0_i32 = arith.constant 0 : i32
    %c0_i32_0 = arith.constant 0 : i32
    return %arg0, %c0_i32 : i32, i32
  }
  func.func @transform_1(%arg0: i32) -> (i32, i32) {
    %c0_i32 = arith.constant 0 : i32
    %c0_i32_0 = arith.constant 0 : i32
    %c0_i32_1 = arith.constant 0 : i32
    return %c0_i32, %c0_i32_0 : i32, i32
  }
  func.func @transform_2(%arg0: i32) -> (i32, i32) {
    %c0_i32 = arith.constant 0 : i32
    %c0_i32_0 = arith.constant 0 : i32
    %c0_i32_1 = arith.constant 0 : i32
    return %c0_i32, %c0_i32_0 : i32, i32
  }
  func.func @transform_3(%arg0: i32) -> (i32, i32) {
    %c0_i32 = arith.constant 0 : i32
    %c0_i32_0 = arith.constant 0 : i32
    %c0_i32_1 = arith.constant 0 : i32
    return %c0_i32, %c0_i32_0 : i32, i32
  }
  func.func @transform_4(%arg0: i32) -> (i32, i32) {
    %c0_i32 = arith.constant 0 : i32
    %c0_i32_0 = arith.constant 0 : i32
    return %arg0, %c0_i32 : i32, i32
  }
}

</mosaic_0001>

<llo_original>
// kernel: tpu_custom_call.1
$region0: #{tpu_custom_call.1}
  #allocation0 [shape = 'u32[]', space=smem, size = 0x4, offset = 0x4, fixed_abs, tag = 'smem constant byte address 0x4 - core index']
  #allocation1 [shape = 'u32[144,128]{1,0:T(1,128)}', space=vmem, size = 0x12000, scoped, tag = 'internal scratch']
  %s0 = inlined_call_operand.vmem [shape: f32[8,1], index: 0, kind: input, shape index: {}]
  %s1 = inlined_call_operand.vmem [shape: f32[4,32], index: 1, kind: input, shape index: {}]
  %s2 = inlined_call_operand.vmem [shape: f32[8,32], index: 2, kind: input, shape index: {}]
  %s3 = inlined_call_operand.vmem [shape: f32[32,8], index: 3, kind: input, shape index: {}]
  %s4 = inlined_call_operand.hbm [shape: f32[8,8], index: 4, kind: output, shape index: {}]
  %s5 = sld [smem:[#allocation0]]
  $region26: #{tpu_custom_call.1} parent=0
    _
  %s7 = ssub.s32 1, %s5
  %s8 = scalar_select 0, %s7, %s5
  $region1: #{tpu_custom_call.1} parent=0
    #allocation2 [shape = 'u8[4096]{0}', space=vmem, size = 0x1000, scoped, tag = 'output window, operand 0, single buffered']
    #allocation3 [shape = 's32[1]{0}', space=sflag, size = 0x4, scoped, tag = 'scoped memory for tpu_custom_call.1']
    %9 = vsyncpa [#allocation3], 0
    // Predicated region
    $region2: #{tpu_custom_call.1} parent=1 // pred_check
      _
    $region3: #{tpu_custom_call.1} parent=1 // pred_check_branch
      %11 = sbr.rel (0) target = $region5
    $region4: #{tpu_custom_call.1} parent=1 // pred_region
      _
    $region5: #{tpu_custom_call.1} parent=1 // pred_fallthru
      _
    // Predicated region
    $region6: #{tpu_custom_call.1} parent=1 // pred_check
      _
    $region7: #{tpu_custom_call.1} parent=1 // pred_check_branch
      %13 = sbr.rel (0) target = $region9
    $region8: #{tpu_custom_call.1} parent=1 // pred_region
      _
    $region9: #{tpu_custom_call.1} parent=1 // pred_fallthru
      _
    // Predicated region
    $region10: #{tpu_custom_call.1} parent=1 // pred_check
      _
    $region11: #{tpu_custom_call.1} parent=1 // pred_check_branch
      %15 = sbr.rel (0) target = $region13
    $region12: #{tpu_custom_call.1} parent=1 // pred_region
      _
    $region13: #{tpu_custom_call.1} parent=1 // pred_fallthru
      _
    // Predicated region
    $region14: #{tpu_custom_call.1} parent=1 // pred_check
      _
    $region15: #{tpu_custom_call.1} parent=1 // pred_check_branch
      %17 = sbr.rel (0) target = $region17
    $region16: #{tpu_custom_call.1} parent=1 // pred_region
      _
    $region17: #{tpu_custom_call.1} parent=1 // pred_fallthru
      _
    %v18 = vld [vmem:[%s0] sm:$0xff]
    %v19 = vld [vmem:[%s1] sm:$0x1]
    %v20 = vld [vmem:[%s1 + $0x1] sm:$0x1]
    %v21 = vld [vmem:[%s1 + $0x2] sm:$0x1]
    %v22 = vld [vmem:[%s1 + $0x3] sm:$0x1]
    %24 = vset.pattern.permute.xlu0 0
    %25 = vperm.xlu0 %24, %v18
    %v26 = vpop.permute.xlu0 %25
    %v28 = vlaneseq
    %v29 = vshrl.u32 %v28, 7
    %v30 = vsub.s32 0, %v29
    %v31 = vrot.slane %v20, %v30
    %v32 = vmul.f32 %v26, %v31
    %v33 = vlaneseq
    %v34 = vshrl.u32 %v33, 7
    %v35 = vsub.s32 0, %v34
    %v36 = vrot.slane %v19, %v35
    %v37 = vadd.f32 %v36, %v32
    %v38 = vld [vmem:[%s2] sm:$0xff]
    %v39 = vlaneseq
    %v40 = vshrl.u32 %v39, 7
    %v41 = vsub.s32 0, %v40
    %v42 = vrot.slane %v21, %v41
    %vm43 = vcmask 64512
    %v45 = vsel %vm43, %v37, 0
    %47 = vmatprep.subr.mxu0 0.0
    %48 = vmatpush1.msra.mxu0 0.0
    %49 = vmatprep.subr.mxu0 0.0
    %50 = vmatpush1.msra.mxu0 0.0
    %51 = vmatprep.subr.mxu0 0.0
    %52 = vmatpush1.msra.mxu0 0.0
    %53 = vmatprep.subr.mxu0 0.0
    %54 = vmatpush1.msra.mxu0 0.0
    %55 = vmatprep.subr.mxu0 0.0
    %56 = vmatpush1.msra.mxu0 0.0
    %57 = vmatprep.subr.mxu0 0.0
    %58 = vmatpush1.msra.mxu0 0.0
    %59 = vmatprep.subr.mxu0 0.0
    %60 = vmatpush1.msra.mxu0 0.0
    %61 = vmatprep.subr.mxu0 0.0
    %62 = vmatpush1.msra.mxu0 0.0
    %63 = vmatprep.subr.mxu0 0.0
    %64 = vmatpush1.msra.mxu0 0.0
    %65 = vmatprep.subr.mxu0 0.0
    %66 = vmatpush1.msra.mxu0 0.0
    %67 = vmatprep.subr.mxu0 0.0
    %68 = vmatpush1.msra.mxu0 0.0
    %69 = vmatprep.subr.mxu0 0.0
    %70 = vmatpush1.msra.mxu0 0.0
    %71 = vmatprep.subr.mxu0 0.0
    %72 = vmatpush1.msra.mxu0 0.0
    %73 = vmatprep.subr.mxu0 0.0
    %74 = vmatpush1.msra.mxu0 0.0
    %75 = vmatprep.subr.mxu0 0.0
    %76 = vmatpush1.msra.mxu0 0.0
    %77 = vmatprep.subr.mxu0 0.0
    %78 = vmatpush1.msra.mxu0 %v38
    %79 = vmatprep.subr.mxu0 0.0
    %80 = vmatpush2.msra.mxu0 0.0
    %81 = vmatprep.subr.mxu0 0.0
    %82 = vmatpush2.msra.mxu0 0.0
    %83 = vmatprep.subr.mxu0 0.0
    %84 = vmatpush2.msra.mxu0 0.0
    %85 = vmatprep.subr.mxu0 0.0
    %86 = vmatpush2.msra.mxu0 0.0
    %87 = vmatprep.subr.mxu0 0.0
    %88 = vmatpush2.msra.mxu0 0.0
    %89 = vmatprep.subr.mxu0 0.0
    %90 = vmatpush2.msra.mxu0 0.0
    %91 = vmatprep.subr.mxu0 0.0
    %92 = vmatpush2.msra.mxu0 0.0
    %93 = vmatprep.subr.mxu0 0.0
    %94 = vmatpush2.msra.mxu0 0.0
    %95 = vmatprep.subr.mxu0 0.0
    %96 = vmatpush2.msra.mxu0 0.0
    %97 = vmatprep.subr.mxu0 0.0
    %98 = vmatpush2.msra.mxu0 0.0
    %99 = vmatprep.subr.mxu0 0.0
    %100 = vmatpush2.msra.mxu0 0.0
    %101 = vmatprep.subr.mxu0 0.0
    %102 = vmatpush2.msra.mxu0 0.0
    %103 = vmatprep.subr.mxu0 0.0
    %104 = vmatpush2.msra.mxu0 0.0
    %105 = vmatprep.subr.mxu0 0.0
    %106 = vmatpush2.msra.mxu0 0.0
    %107 = vmatprep.subr.mxu0 0.0
    %108 = vmatpush2.msra.mxu0 0.0
    %109 = vmatprep.subr.mxu0 0.0
    %110 = vmatpush2.msra.mxu0 0.0
    %111 = vmatprep.mubr.f32.mxu0 0.0
    %112 = vmatmul.mubr.f32.gmra.mxu0 %v45
    %v113 = vpop.f32.mrf.mxu0
    %v114 = vadd.f32 %v42, %v113
    %v115 = vpop.f32.mrf.mxu0
    %116 = vdwg.mxu0
    %v117 = vtanh.pop %v114
    %v118 = vld [vmem:[%s3] sm:$0xff]
    %v119 = vld [vmem:[%s3 + $0x8] sm:$0xff]
    %v120 = vld [vmem:[%s3 + $0x10] sm:$0xff]
    %v121 = vld [vmem:[%s3 + $0x18] sm:$0xff]
    %v122 = vlaneseq
    %v123 = vshrl.u32 %v122, 7
    %v124 = vsub.s32 0, %v123
    %v125 = vrot.slane %v22, %v124
    %vm126 = vcmask 261120
    %v128 = vsel %vm126, %v117, 0
    %130 = vmatprep.subr.mxu0 0.0
    %131 = vmatpush1.msra.mxu0 0.0
    %132 = vmatprep.subr.mxu0 0.0
    %133 = vmatpush1.msra.mxu0 0.0
    %134 = vmatprep.subr.mxu0 0.0
    %135 = vmatpush1.msra.mxu0 0.0
    %136 = vmatprep.subr.mxu0 0.0
    %137 = vmatpush1.msra.mxu0 0.0
    %138 = vmatprep.subr.mxu0 0.0
    %139 = vmatpush1.msra.mxu0 0.0
    %140 = vmatprep.subr.mxu0 0.0
    %141 = vmatpush1.msra.mxu0 0.0
    %142 = vmatprep.subr.mxu0 0.0
    %143 = vmatpush1.msra.mxu0 0.0
    %144 = vmatprep.subr.mxu0 0.0
    %145 = vmatpush1.msra.mxu0 0.0
    %146 = vmatprep.subr.mxu0 0.0
    %147 = vmatpush1.msra.mxu0 0.0
    %148 = vmatprep.subr.mxu0 0.0
    %149 = vmatpush1.msra.mxu0 0.0
    %150 = vmatprep.subr.mxu0 0.0
    %151 = vmatpush1.msra.mxu0 0.0
    %152 = vmatprep.subr.mxu0 0.0
    %153 = vmatpush1.msra.mxu0 0.0
    %154 = vmatprep.subr.mxu0 0.0
    %155 = vmatpush1.msra.mxu0 %v121
    %156 = vmatprep.subr.mxu0 0.0
    %157 = vmatpush1.msra.mxu0 %v120
    %158 = vmatprep.subr.mxu0 0.0
    %159 = vmatpush1.msra.mxu0 %v119
    %160 = vmatprep.subr.mxu0 0.0
    %161 = vmatpush1.msra.mxu0 %v118
    %162 = vmatprep.subr.mxu0 0.0
    %163 = vmatpush2.msra.mxu0 0.0
    %164 = vmatprep.subr.mxu0 0.0
    %165 = vmatpush2.msra.mxu0 0.0
    %166 = vmatprep.subr.mxu0 0.0
    %167 = vmatpush2.msra.mxu0 0.0
    %168 = vmatprep.subr.mxu0 0.0
    %169 = vmatpush2.msra.mxu0 0.0
    %170 = vmatprep.subr.mxu0 0.0
    %171 = vmatpush2.msra.mxu0 0.0
    %172 = vmatprep.subr.mxu0 0.0
    %173 = vmatpush2.msra.mxu0 0.0
    %174 = vmatprep.subr.mxu0 0.0
    %175 = vmatpush2.msra.mxu0 0.0
    %176 = vmatprep.subr.mxu0 0.0
    %177 = vmatpush2.msra.mxu0 0.0
    %178 = vmatprep.subr.mxu0 0.0
    %179 = vmatpush2.msra.mxu0 0.0
    %180 = vmatprep.subr.mxu0 0.0
    %181 = vmatpush2.msra.mxu0 0.0
    %182 = vmatprep.subr.mxu0 0.0
    %183 = vmatpush2.msra.mxu0 0.0
    %184 = vmatprep.subr.mxu0 0.0
    %185 = vmatpush2.msra.mxu0 0.0
    %186 = vmatprep.subr.mxu0 0.0
    %187 = vmatpush2.msra.mxu0 0.0
    %188 = vmatprep.subr.mxu0 0.0
    %189 = vmatpush2.msra.mxu0 0.0
    %190 = vmatprep.subr.mxu0 0.0
    %191 = vmatpush2.msra.mxu0 0.0
    %192 = vmatprep.subr.mxu0 0.0
    %193 = vmatpush2.msra.mxu0 0.0
    %194 = vmatprep.mubr.f32.mxu0 0.0
    %195 = vmatmul.mubr.f32.gmra.mxu0 %v128
    %v196 = vpop.f32.mrf.mxu0
    %v197 = vadd.f32 %v125, %v196
    %v198 = vpop.f32.mrf.mxu0
    %199 = vdwg.mxu0
    %200 = vst.msk [vmem:[#allocation2] sm:$0xff] %vm43, %v197
    // Predicated region
    $region18: #{tpu_custom_call.1} parent=1 // pred_check
      _
    $region19: #{tpu_custom_call.1} parent=1 // pred_check_branch
      %202 = sbr.rel (0) target = $region21
    $region20: #{tpu_custom_call.1} parent=1 // pred_region
      %s204 = ssub.s32 128, 128
      %205 = vsyncadd [#allocation3], %s204
      %s207 = sshll.u32 [#allocation2], 4
      %s208 = int_to_ptr.vmem [resolvable:$true] %s207
      %210 = dma.vmem_to_hbm [thread:$0]  %s208, 128, %s4, [#allocation3]
    $region21: #{tpu_custom_call.1} parent=1 // pred_fallthru
      _
    // Predicated region
    $region22: #{tpu_custom_call.1} parent=1 // pred_check
      _
    $region23: #{tpu_custom_call.1} parent=1 // pred_check_branch
      %212 = sbr.rel (0) target = $region25
    $region24: #{tpu_custom_call.1} parent=1 // pred_region
      %213 = dma.done [#allocation3], 128
    $region25: #{tpu_custom_call.1} parent=1 // pred_fallthru
      _
    %214 = vsyncpa [#allocation3], 1

</llo_original>
